<compile_context>
chip_gen: v5e
topology: v5e:2x2
jax: 0.10.0
libtpu: 0.0.40
codegen_flags: <defaults>
</compile_context>

<pallas_src>
import functools
import math

import numpy as np
import jax
import jax.numpy as jnp
from jax.experimental import pallas as pl
from jax.experimental.pallas import tpu as pltpu


def _round_up(x, m):
    return (x + m - 1) // m * m


def _window_head_attention_kernel(S, S_pad, W, use_roll, scale, *refs):
    """One grid step == one batch tile of TB rows.

    refs (roll path):  q, kv, wq, wkv, o
    refs (band path):  q, kv, wq, wkv, band, o
      q   : (TB, Dq)        kv  : (TB*S_pad, Dk+Dv)
      wq  : (Dq, HS_p)      wkv : (Dk+Dv, HS_p+H_p)  (block-diagonal)
      band: (HS_p, H_p)     o   : (TB, H_p)
    """
    if use_roll:
        q_ref, kv_ref, wq_ref, wkv_ref, o_ref = refs
        band_ref = None
    else:
        q_ref, kv_ref, wq_ref, wkv_ref, band_ref, o_ref = refs

    TB = q_ref.shape[0]
    HS_p = wq_ref.shape[1]
    H_p = o_ref.shape[1]

    # Query projection (small).  On the roll path the 1/sqrt(W) scale is folded
    # here -- the cheapest place to apply it.
    queries = jnp.dot(q_ref[...], wq_ref[...],
                      preferred_element_type=jnp.float32)             # (TB, HS_p)
    if use_roll:
        queries = queries * scale

    # Packed K/V projection: one MXU matmul; split at a 128-aligned boundary.
    ckv = jnp.dot(kv_ref[...], wkv_ref[...],
                  preferred_element_type=jnp.float32)                 # (TB*S_pad, HS_p+H_p)
    context = ckv[:, :HS_p]                                           # (TB*S_pad, HS_p)
    values = ckv[:, HS_p:]                                            # (TB*S_pad, H_p)

    # prods[b, s, :] = queries[b, :] * context[b, s, :]
    prods = queries[:, None, :] * context.reshape(TB, S_pad, HS_p)    # (TB, S_pad, HS_p)

    if use_roll:
        # Window sum with wrap-around: wq/wk were column-tiled in the wrapper,
        # so prods is periodic (period HS) along the padded lane dim and the
        # wrap becomes a plain lane rotation.  shift = HS_p - j == roll by -j.
        p2 = prods.reshape(TB * S_pad, HS_p)
        acc = p2
        for j in range(1, W):
            acc = acc + pltpu.roll(p2, shift=HS_p - j, axis=1)        # XLU + VPU
        weights = acc.reshape(TB, S_pad, H_p)                         # H_p == HS_p here
    else:
        # stride > 1: constant band/selection matrix (folds wrap, the ones(W)
        # conv with stride, and the 1/sqrt(W) scale).  HIGH = bf16_3x, ~f32
        # accurate at half the MXU work of HIGHEST.
        w2 = jnp.dot(prods.reshape(TB * S_pad, HS_p), band_ref[...],
                     preferred_element_type=jnp.float32,
                     precision=jax.lax.Precision.HIGH)
        weights = w2.reshape(TB, S_pad, H_p)

    # Mask padded sequence rows (only emitted when S was actually padded).
    if S_pad != S:
        s_idx = jax.lax.broadcasted_iota(jnp.int32, weights.shape, 1)
        weights = jnp.where(s_idx < S, weights, -1e30)

    # Softmax over the sequence axis (== torch transpose(1,2) + softmax(-1)).
    m = jnp.max(weights, axis=1, keepdims=True)                       # (TB, 1, H_p)
    e = jnp.exp(weights - m)
    denom = jnp.sum(e, axis=1, keepdims=True)
    inv = pl.reciprocal(denom, approx=True)                           # EUP slot
    inv = inv * (2.0 - denom * inv)                                   # Newton step -> ~f32
    alphas = e * inv                                                  # (TB, S_pad, H_p)

    red = jnp.sum(values.reshape(TB, S_pad, H_p) * alphas, axis=1)    # (TB, H_p)
    o_ref[...] = red.astype(o_ref.dtype)


def window_head_attention(query, key, val, wq_t, wk_t, wv_t, *,
                          windowsize=5, stride=1, kv_dtype=None, block_b=None):
    """Pallas wrapper. wq_t/wk_t/wv_t are transposed nn.Linear weights (in, out)."""
    B, Dq = query.shape
    _, S, Dk = key.shape
    _, _, Dv = val.shape
    HS = wq_t.shape[1]            # hdim * stride
    H = HS // stride
    W = windowsize
    DKV = Dk + Dv

    # Lane-dense padded widths (multiples of 128) and sublane-aligned S.
    HS_p = _round_up(HS, 128)
    H_p = _round_up(H, 128)
    S_pad = _round_up(S, 8)

    # Roll path is valid when stride == 1 and the padded lane width can hold
    # the window overhang (always true when HS is already a 128 multiple).
    use_roll = (stride == 1) and (HS == HS_p or HS + W - 1 <= HS_p)
    scale = 1.0 / math.sqrt(float(W))

    kv_dt = jnp.float32 if kv_dtype is None else kv_dtype
    kv_bytes = int(np.dtype(kv_dt).itemsize)

    # ---- per-generation VMEM budget + explicit scoped limit ----------------
    try:
        vmem_cap = int(pltpu.get_tpu_info().vmem_capacity_bytes)
    except Exception:  # pragma: no cover - conservative fallback (v7x per-TC)
        vmem_cap = 64 * 1024 * 1024
    budget = min(vmem_cap // 2, 48 * 1024 * 1024)   # ~48 MiB v5e/v6e, ~32 MiB v7x

    def step_bytes(t):
        io = 2 * (t * Dq * 4 + t * S_pad * DKV * kv_bytes + t * H_p * 4)
        wts = 2 * (Dq * HS_p + DKV * (HS_p + H_p)
                   + (0 if use_roll else HS_p * H_p)) * 4
        inter = t * S_pad * (2 * HS_p + 4 * H_p) * 4 + 2 * t * HS_p * 4
        return io + wts + inter

    if block_b is None:
        # ~2048 flattened K/V rows per step (MXU M occupancy / HBM roofline),
        # shrunk to the VMEM budget, multiple of 8 (sublane).
        tb = _round_up(max(8, pl.cdiv(2048, S_pad)), 8)
        while tb > 8 and step_bytes(tb) > budget:
            tb -= 8
        # Guarantee >= 2 grid steps when the batch allows it: shards work
        # across v7x's two TensorCores and gives DMA/compute overlap.
        if B > 8:
            tb = min(tb, max(8, _round_up(pl.cdiv(B, 2), 8)))
        block_b = tb

    if B <= block_b:
        TB, B_pad = B, B
    else:
        TB = block_b
        B_pad = _round_up(B, TB)

    vmem_limit = step_bytes(TB) + (8 << 20)
    vmem_limit = max(vmem_limit, 16 << 20)
    vmem_limit = int(min(vmem_limit, vmem_cap * 3 // 4))

    # ---- weights ------------------------------------------------------------
    f32 = jnp.float32
    if use_roll:
        # Column-tile (periodic pad) wq/wk so prods is periodic with period HS
        # along the padded lane dim -> wrap-around becomes a lane rotation.
        cols = jnp.arange(HS_p) % HS
        wq_p = wq_t.astype(f32)[:, cols]
        wk_p = wk_t.astype(f32)[:, cols]
    else:
        wq_p = jnp.pad(wq_t.astype(f32), ((0, 0), (0, HS_p - HS)))
        wk_p = jnp.pad(wk_t.astype(f32), ((0, 0), (0, HS_p - HS)))
    wv_p = jnp.pad(wv_t.astype(f32), ((0, 0), (0, H_p - H)))

    # Block-diagonal packed K/V weight: [[wk_p, 0], [0, wv_p]].
    wkv_p = jnp.zeros((DKV, HS_p + H_p), f32)
    wkv_p = wkv_p.at[:Dk, :HS_p].set(wk_p)
    wkv_p = wkv_p.at[Dk:, HS_p:].set(wv_p)

    band = None
    if not use_roll:
        # band[i, h] = (#j in [0,W) with (h*stride + j) mod HS == i) / sqrt(W)
        band_np = np.zeros((HS_p, H_p), np.float32)
        for h in range(H):
            for j in range(W):
                band_np[(h * stride + j) % HS, h] += scale
        band = jnp.asarray(band_np)

    # ---- data padding / packing ---------------------------------------------
    if B_pad != B:
        query = jnp.pad(query, ((0, B_pad - B), (0, 0)))
        key = jnp.pad(key, ((0, B_pad - B), (0, 0), (0, 0)))
        val = jnp.pad(val, ((0, B_pad - B), (0, 0), (0, 0)))
    if S_pad != S:
        key = jnp.pad(key, ((0, 0), (0, S_pad - S), (0, 0)))
        val = jnp.pad(val, ((0, 0), (0, S_pad - S), (0, 0)))

    # One packed (B*S, Dk+Dv) K/V operand (one wide matmul + one input DMA).
    # TODO(synk): in a fused pipeline the producer should emit K/V pre-packed;
    # here the pack is a one-off XLA concat outside the kernel.
    kv_flat = jnp.concatenate(
        [key.reshape(B_pad * S_pad, Dk), val.reshape(B_pad * S_pad, Dv)],
        axis=-1)

    if kv_dtype is not None:
        kv_flat = kv_flat.astype(kv_dtype)
        wkv_in = wkv_p.astype(kv_dtype)
    else:
        wkv_in = wkv_p

    # ---- cost estimate (scheduler hint) --------------------------------------
    flops = (2 * B_pad * Dq * HS_p
             + 2 * B_pad * S_pad * DKV * (HS_p + H_p))
    if use_roll:
        flops += B_pad * S_pad * HS_p * (W + 1)
    else:
        flops += 2 * B_pad * S_pad * HS_p * H_p
    flops += 6 * B_pad * S_pad * H_p
    bytes_accessed = (query.size * 4 + kv_flat.size * kv_bytes
                      + wq_p.size * 4 + wkv_in.size * kv_bytes
                      + (0 if use_roll else band.size * 4)
                      + B_pad * H_p * 4)
    cost = pl.CostEstimate(flops=int(flops),
                           transcendentals=int(B_pad * S_pad * H_p),
                           bytes_accessed=int(bytes_accessed))

    # ---- pallas_call ----------------------------------------------------------
    kernel = functools.partial(_window_head_attention_kernel,
                               S, S_pad, W, use_roll, scale)

    in_specs = [
        pl.BlockSpec((TB, Dq), lambda b: (b, 0)),
        pl.BlockSpec((TB * S_pad, DKV), lambda b: (b, 0)),
        pl.BlockSpec((Dq, HS_p), lambda b: (0, 0)),
        pl.BlockSpec((DKV, HS_p + H_p), lambda b: (0, 0)),
    ]
    args = [query, kv_flat, wq_p, wkv_in]
    if not use_roll:
        in_specs.append(pl.BlockSpec((HS_p, H_p), lambda b: (0, 0)))
        args.append(band)

    out = pl.pallas_call(
        kernel,
        out_shape=jax.ShapeDtypeStruct((B_pad, H_p), jnp.float32),
        grid=(B_pad // TB,),
        in_specs=in_specs,
        out_specs=pl.BlockSpec((TB, H_p), lambda b: (b, 0)),
        compiler_params=pltpu.CompilerParams(
            dimension_semantics=("parallel",),
            vmem_limit_bytes=vmem_limit),
        cost_estimate=cost,
    )(*args)
    return out[:B, :H]


def reference(query, key, val, wq_t, wk_t, wv_t, *, windowsize=5, stride=1):
    """Pure-JAX reference mirroring the PyTorch forward exactly."""
    W = windowsize
    HS = wq_t.shape[1]
    H = HS // stride
    queries = query @ wq_t                                        # (B, HS)
    context = jnp.einsum("bsd,dh->bsh", key, wk_t)                # (B, S, HS)
    prods = queries[:, None, :] * context
    _prods = jnp.concatenate([prods, prods[:, :, :W + 1]], axis=-1)
    weights = sum(_prods[:, :, j:j + H * stride:stride] for j in range(W))
    weights = weights / jnp.sqrt(jnp.float32(W))                  # (B, S, H)
    alphas = jax.nn.softmax(weights, axis=1)                      # softmax over S
    values = jnp.einsum("bsd,dh->bsh", val, wv_t)                 # (B, S, H)
    return jnp.sum(values * alphas, axis=1)                       # (B, H)


if __name__ == "__main__":
    # TODO(synk): usevallin=False (identity value path) is not wired up here;
    # pass an identity wv_t if needed.  Dropouts are identity in eval mode.
    B, S = 2, 8
    querydim = keydim = valdim = 32
    hdim = 32
    windowsize = 5

    key0 = jax.random.PRNGKey(0)
    k1, k2, k3, k4, k5, k6, k7, k8 = jax.random.split(key0, 8)

    query = jax.random.normal(k1, (B, querydim), dtype=jnp.float32)
    key_in = jax.random.normal(k2, (B, S, keydim), dtype=jnp.float32)
    val_in = jax.random.normal(k3, (B, S, valdim), dtype=jnp.float32)

    # nn.Linear-style deterministic init (uniform +-1/sqrt(fan_in)), stored
    # pre-transposed as (in, out).
    def lin_w(k, fan_in, fan_out):
        bound = 1.0 / math.sqrt(fan_in)
        return jax.random.uniform(k, (fan_in, fan_out), jnp.float32, -bound, bound)

    # --- stride = 1 (pltpu.roll fast path) ---
    stride = 1
    wq_t = lin_w(k4, querydim, hdim * stride)
    wk_t = lin_w(k5, keydim, hdim * stride)
    wv_t = lin_w(k6, valdim, hdim)

    out = window_head_attention(query, key_in, val_in, wq_t, wk_t, wv_t,
                                windowsize=windowsize, stride=stride)
    out = jax.block_until_ready(out)
    ref = jax.block_until_ready(
        reference(query, key_in, val_in, wq_t, wk_t, wv_t,
                  windowsize=windowsize, stride=stride))
    assert out.shape == (B, hdim)
    assert jnp.allclose(out, ref, rtol=1e-4, atol=1e-4), (
        f"stride=1 mismatch: max abs err {jnp.max(jnp.abs(out - ref))}")

    # --- stride = 2 (band-matrix path, Precision.HIGH) ---
    stride = 2
    wq_t2 = lin_w(k7, querydim, hdim * stride)
    wk_t2 = lin_w(k8, keydim, hdim * stride)

    out2 = window_head_attention(query, key_in, val_in, wq_t2, wk_t2, wv_t,
                                 windowsize=windowsize, stride=stride)
    out2 = jax.block_until_ready(out2)
    ref2 = jax.block_until_ready(
        reference(query, key_in, val_in, wq_t2, wk_t2, wv_t,
                  windowsize=windowsize, stride=stride))
    assert out2.shape == (B, hdim)
    assert jnp.allclose(out2, ref2, rtol=1e-4, atol=1e-4), (
        f"stride=2 mismatch: max abs err {jnp.max(jnp.abs(out2 - ref2))}")

    print("KERNEL_OK")
</pallas_src>

<mosaic_0001>
module attributes {stable_mosaic.version = 11 : i64} {
  func.func @_window_head_attention_kernel(%arg0: i32, %arg1: memref<2x32xf32, #tpu.memory_space<vmem>>, %arg2: memref<16x64xf32, #tpu.memory_space<vmem>>, %arg3: memref<32x128xf32, #tpu.memory_space<vmem>>, %arg4: memref<64x256xf32, #tpu.memory_space<vmem>>, %arg5: memref<2x128xf32, #tpu.memory_space<vmem>>) attributes {dimension_semantics = [#tpu.dimension_semantics<parallel>], iteration_bounds = array<i64: 1>, scalar_prefetch = 0 : i64, scratch_operands = 0 : i64, tpu.core_type = #tpu.core_type<tc>, window_params = [{transform_indices = @transform_0, window_bounds = array<i64: 2, 32>}, {transform_indices = @transform_1, window_bounds = array<i64: 16, 64>}, {pipeline_mode = #tpu.pipeline_mode<synchronous>, transform_indices = @transform_2, window_bounds = array<i64: 32, 128>}, {pipeline_mode = #tpu.pipeline_mode<synchronous>, transform_indices = @transform_3, window_bounds = array<i64: 64, 256>}, {transform_indices = @transform_4, window_bounds = array<i64: 2, 128>}]} {
    %c0 = arith.constant 0 : index
    %c0_0 = arith.constant 0 : index
    %0 = vector.load %arg1[%c0, %c0_0] : memref<2x32xf32, #tpu.memory_space<vmem>>, vector<2x32xf32>
    %c0_1 = arith.constant 0 : index
    %c0_2 = arith.constant 0 : index
    %1 = vector.load %arg3[%c0_1, %c0_2] : memref<32x128xf32, #tpu.memory_space<vmem>>, vector<32x128xf32>
    %cst = arith.constant dense<0.000000e+00> : vector<2x128xf32>
    %2 = tpu.matmul %0, %1, %cst {dimension_numbers = #tpu.dot_dimension_numbers<[1], [0], [0], [1], [0, 0, 1, 1], [], []>} : vector<2x32xf32>, vector<32x128xf32>, vector<2x128xf32> -> vector<2x128xf32>
    %cst_3 = arith.constant 0.44721359 : f32
    %3 = vector.broadcast %cst_3 : f32 to vector<2x128xf32>
    %4 = arith.mulf %2, %3 : vector<2x128xf32>
    %c0_4 = arith.constant 0 : index
    %c0_5 = arith.constant 0 : index
    %5 = vector.load %arg2[%c0_4, %c0_5] : memref<16x64xf32, #tpu.memory_space<vmem>>, vector<16x64xf32>
    %c0_6 = arith.constant 0 : index
    %c0_7 = arith.constant 0 : index
    %6 = vector.load %arg4[%c0_6, %c0_7] : memref<64x256xf32, #tpu.memory_space<vmem>>, vector<64x256xf32>
    %cst_8 = arith.constant dense<0.000000e+00> : vector<16x256xf32>
    %7 = tpu.matmul %5, %6, %cst_8 {dimension_numbers = #tpu.dot_dimension_numbers<[1], [0], [0], [1], [0, 0, 1, 1], [], []>} : vector<16x64xf32>, vector<64x256xf32>, vector<16x256xf32> -> vector<16x256xf32>
    %8 = vector.extract_strided_slice %7 {offsets = [0, 0], sizes = [16, 128], strides = [1, 1]} : vector<16x256xf32> to vector<16x128xf32>
    %9 = vector.extract_strided_slice %7 {offsets = [0, 128], sizes = [16, 128], strides = [1, 1]} : vector<16x256xf32> to vector<16x128xf32>
    %10 = vector.shape_cast %4 : vector<2x128xf32> to vector<2x1x128xf32>
    %11 = vector.shape_cast %8 : vector<16x128xf32> to vector<2x8x128xf32>
    %12 = vector.broadcast %10 : vector<2x1x128xf32> to vector<2x8x128xf32>
    %13 = arith.mulf %12, %11 : vector<2x8x128xf32>
    %14 = vector.shape_cast %13 : vector<2x8x128xf32> to vector<16x128xf32>
    %c127_i32 = arith.constant 127 : i32
    %15 = tpu.dynamic_rotate %14 by %c127_i32 dim 1 : vector<16x128xf32>, i32 -> vector<16x128xf32>
    %16 = arith.addf %14, %15 : vector<16x128xf32>
    %c126_i32 = arith.constant 126 : i32
    %17 = tpu.dynamic_rotate %14 by %c126_i32 dim 1 : vector<16x128xf32>, i32 -> vector<16x128xf32>
    %18 = arith.addf %16, %17 : vector<16x128xf32>
    %c125_i32 = arith.constant 125 : i32
    %19 = tpu.dynamic_rotate %14 by %c125_i32 dim 1 : vector<16x128xf32>, i32 -> vector<16x128xf32>
    %20 = arith.addf %18, %19 : vector<16x128xf32>
    %c124_i32 = arith.constant 124 : i32
    %21 = tpu.dynamic_rotate %14 by %c124_i32 dim 1 : vector<16x128xf32>, i32 -> vector<16x128xf32>
    %22 = arith.addf %20, %21 : vector<16x128xf32>
    %23 = vector.shape_cast %22 : vector<16x128xf32> to vector<2x8x128xf32>
    %cst_9 = arith.constant dense<0xFF800000> : vector<2x128xf32>
    %24 = vector.multi_reduction <maximumf>, %23, %cst_9 [1] : vector<2x8x128xf32> to vector<2x128xf32>
    %25 = vector.shape_cast %24 : vector<2x128xf32> to vector<2x1x128xf32>
    %26 = vector.broadcast %25 : vector<2x1x128xf32> to vector<2x8x128xf32>
    %27 = arith.subf %23, %26 : vector<2x8x128xf32>
    %28 = math.exp %27 : vector<2x8x128xf32>
    %cst_10 = arith.constant dense<0.000000e+00> : vector<2x128xf32>
    %29 = vector.multi_reduction <add>, %28, %cst_10 [1] : vector<2x8x128xf32> to vector<2x128xf32>
    %30 = vector.shape_cast %29 : vector<2x128xf32> to vector<2x1x128xf32>
    %31 = tpu.reciprocal %30 {approx = true} : vector<2x1x128xf32> -> vector<2x1x128xf32>
    %32 = arith.mulf %30, %31 : vector<2x1x128xf32>
    %cst_11 = arith.constant 2.000000e+00 : f32
    %33 = vector.broadcast %cst_11 : f32 to vector<2x1x128xf32>
    %34 = arith.subf %33, %32 : vector<2x1x128xf32>
    %35 = arith.mulf %31, %34 : vector<2x1x128xf32>
    %36 = vector.broadcast %35 : vector<2x1x128xf32> to vector<2x8x128xf32>
    %37 = arith.mulf %28, %36 : vector<2x8x128xf32>
    %38 = vector.shape_cast %9 : vector<16x128xf32> to vector<2x8x128xf32>
    %39 = arith.mulf %38, %37 : vector<2x8x128xf32>
    %cst_12 = arith.constant dense<0.000000e+00> : vector<2x128xf32>
    %40 = vector.multi_reduction <add>, %39, %cst_12 [1] : vector<2x8x128xf32> to vector<2x128xf32>
    %c0_13 = arith.constant 0 : index
    %c0_14 = arith.constant 0 : index
    %41 = vector.load %arg5[%c0_13, %c0_14] : memref<2x128xf32, #tpu.memory_space<vmem>>, vector<2x128xf32>
    tpu.vector_store %arg5[%c0_13, %c0_14], %40 {strides = array<i32>} : memref<2x128xf32, #tpu.memory_space<vmem>>, vector<2x128xf32>,
    return
  }
  func.func @transform_0(%arg0: i32) -> (i32, i32) {
    %c0_i32 = arith.constant 0 : i32
    %c0_i32_0 = arith.constant 0 : i32
    return %arg0, %c0_i32 : i32, i32
  }
  func.func @transform_1(%arg0: i32) -> (i32, i32) {
    %c0_i32 = arith.constant 0 : i32
    %c0_i32_0 = arith.constant 0 : i32
    return %arg0, %c0_i32 : i32, i32
  }
  func.func @transform_2(%arg0: i32) -> (i32, i32) {
    %c0_i32 = arith.constant 0 : i32
    %c0_i32_0 = arith.constant 0 : i32
    %c0_i32_1 = arith.constant 0 : i32
    return %c0_i32, %c0_i32_0 : i32, i32
  }
  func.func @transform_3(%arg0: i32) -> (i32, i32) {
    %c0_i32 = arith.constant 0 : i32
    %c0_i32_0 = arith.constant 0 : i32
    %c0_i32_1 = arith.constant 0 : i32
    return %c0_i32, %c0_i32_0 : i32, i32
  }
  func.func @transform_4(%arg0: i32) -> (i32, i32) {
    %c0_i32 = arith.constant 0 : i32
    %c0_i32_0 = arith.constant 0 : i32
    return %arg0, %c0_i32 : i32, i32
  }
}

</mosaic_0001>

<llo_original>
// kernel: tpu_custom_call.1
$region0: #{tpu_custom_call.1}
  #allocation0 [shape = 'u32[]', space=smem, size = 0x4, offset = 0x4, fixed_abs, tag = 'smem constant byte address 0x4 - core index']
  #allocation1 [shape = 'u32[72,128]{1,0:T(1,128)}', space=vmem, size = 0x9000, scoped, tag = 'internal scratch']
  %s0 = inlined_call_operand.hbm [shape: f32[2,32], index: 0, kind: input, shape index: {}]
  %s1 = inlined_call_operand.hbm [shape: f32[16,64], index: 1, kind: input, shape index: {}]
  %s2 = inlined_call_operand.hbm [shape: f32[32,128], index: 2, kind: input, shape index: {}]
  %s3 = inlined_call_operand.hbm [shape: f32[64,256], index: 3, kind: input, shape index: {}]
  %s4 = inlined_call_operand.hbm [shape: f32[2,128], index: 4, kind: output, shape index: {}]
  %s5 = sld [smem:[#allocation0]]
  $region42: #{tpu_custom_call.1} parent=0
    _
  %s7 = ssub.s32 1, %s5
  %s8 = scalar_select 0, %s7, %s5
  $region1: #{tpu_custom_call.1} parent=0
    #allocation2 [shape = 'u8[1024]{0}', space=vmem, size = 0x400, scoped, tag = 'input window, operand 0, single buffered']
    #allocation3 [shape = 's32[1]{0}', space=sflag, size = 0x4, scoped, tag = 'scoped memory for tpu_custom_call.1']
    #allocation4 [shape = 's32[1]{0}', space=sflag, size = 0x4, scoped, tag = 'scoped memory for tpu_custom_call.1']
    #allocation5 [shape = 'u8[8192]{0}', space=vmem, size = 0x2000, scoped, tag = 'input window, operand 1, single buffered']
    #allocation6 [shape = 's32[1]{0}', space=sflag, size = 0x4, scoped, tag = 'scoped memory for tpu_custom_call.1']
    #allocation7 [shape = 'u8[16384]{0}', space=vmem, size = 0x4000, scoped, tag = 'input window, operand 2, single buffered']
    #allocation8 [shape = 'u8[65536]{0}', space=vmem, size = 0x10000, scoped, tag = 'input window, operand 3, single buffered']
    #allocation9 [shape = 's32[1]{0}', space=sflag, size = 0x4, scoped, tag = 'scoped memory for tpu_custom_call.1']
    #allocation10 [shape = 'u8[1024]{0}', space=vmem, size = 0x400, scoped, tag = 'output window, operand 0, single buffered']
    %9 = vsyncpa [#allocation3], 0
    %10 = vsyncpa [#allocation6], 0
    %11 = vsyncpa [#allocation9], 0
    %12 = vsyncpa [#allocation4], 0
    // Predicated region
    $region2: #{tpu_custom_call.1} parent=1 // pred_check
      _
    $region3: #{tpu_custom_call.1} parent=1 // pred_check_branch
      %14 = sbr.rel (0) target = $region5
    $region4: #{tpu_custom_call.1} parent=1 // pred_region
      %16 = vsyncadd [#allocation3], 0
      %s18 = sshll.u32 %s0, 4
      %s19 = int_to_ptr.hbm [resolvable:$true] %s18
      %s20 = sshll.u32 [#allocation2], 4
      %s21 = int_to_ptr.vmem [resolvable:$true] %s20
      %23 = dma.hbm_to_vmem [thread:$0]  %s19, 32, %s21, [#allocation3]
    $region5: #{tpu_custom_call.1} parent=1 // pred_fallthru
      _
    // Predicated region
    $region6: #{tpu_custom_call.1} parent=1 // pred_check
      _
    $region7: #{tpu_custom_call.1} parent=1 // pred_check_branch
      %25 = sbr.rel (0) target = $region9
    $region8: #{tpu_custom_call.1} parent=1 // pred_region
      %27 = vsyncadd [#allocation6], 0
      %s28 = sshll.u32 %s1, 4
      %s29 = int_to_ptr.hbm [resolvable:$true] %s28
      %s30 = sshll.u32 [#allocation5], 4
      %s31 = int_to_ptr.vmem [resolvable:$true] %s30
      %36 = dma.hbm_to_vmem [thread:$0]  %s29, 256, %s31, [#allocation6], 128, 128, 8
    $region9: #{tpu_custom_call.1} parent=1 // pred_fallthru
      _
    // Predicated region
    $region10: #{tpu_custom_call.1} parent=1 // pred_check
      _
    $region11: #{tpu_custom_call.1} parent=1 // pred_check_branch
      %38 = sbr.rel (0) target = $region13
    $region12: #{tpu_custom_call.1} parent=1 // pred_region
      %40 = vsyncadd [#allocation6], 0
      %s41 = sshll.u32 %s2, 4
      %s42 = int_to_ptr.hbm [resolvable:$true] %s41
      %s43 = sshll.u32 [#allocation7], 4
      %s44 = int_to_ptr.vmem [resolvable:$true] %s43
      %49 = dma.hbm_to_vmem [thread:$0]  %s42, 512, %s44, [#allocation6], 128, 128, 8
    $region13: #{tpu_custom_call.1} parent=1 // pred_fallthru
      _
    // Predicated region
    $region14: #{tpu_custom_call.1} parent=1 // pred_check
      _
    $region15: #{tpu_custom_call.1} parent=1 // pred_check_branch
      %51 = sbr.rel (0) target = $region17
    $region16: #{tpu_custom_call.1} parent=1 // pred_region
      %53 = vsyncadd [#allocation9], 0
      %s54 = sshll.u32 %s3, 4
      %s55 = int_to_ptr.hbm [resolvable:$true] %s54
      %s56 = sshll.u32 [#allocation8], 4
      %s57 = int_to_ptr.vmem [resolvable:$true] %s56
      %62 = dma.hbm_to_vmem [thread:$0]  %s55, 2048, %s57, [#allocation9], 256, 256, 16
    $region17: #{tpu_custom_call.1} parent=1 // pred_fallthru
      _
    // Predicated region
    $region18: #{tpu_custom_call.1} parent=1 // pred_check
      _
    $region19: #{tpu_custom_call.1} parent=1 // pred_check_branch
      %64 = sbr.rel (0) target = $region21
    $region20: #{tpu_custom_call.1} parent=1 // pred_region
      %66 = dma.done [#allocation3], 32
    $region21: #{tpu_custom_call.1} parent=1 // pred_fallthru
      _
    // Predicated region
    $region22: #{tpu_custom_call.1} parent=1 // pred_check
      _
    $region23: #{tpu_custom_call.1} parent=1 // pred_check_branch
      %68 = sbr.rel (0) target = $region25
    $region24: #{tpu_custom_call.1} parent=1 // pred_region
      %70 = dma.done [#allocation6], 256
    $region25: #{tpu_custom_call.1} parent=1 // pred_fallthru
      _
    // Predicated region
    $region26: #{tpu_custom_call.1} parent=1 // pred_check
      _
    $region27: #{tpu_custom_call.1} parent=1 // pred_check_branch
      %72 = sbr.rel (0) target = $region29
    $region28: #{tpu_custom_call.1} parent=1 // pred_region
      %74 = dma.done [#allocation6], 512
    $region29: #{tpu_custom_call.1} parent=1 // pred_fallthru
      _
    // Predicated region
    $region30: #{tpu_custom_call.1} parent=1 // pred_check
      _
    $region31: #{tpu_custom_call.1} parent=1 // pred_check_branch
      %76 = sbr.rel (0) target = $region33
    $region32: #{tpu_custom_call.1} parent=1 // pred_region
      %78 = dma.done [#allocation9], 2048
    $region33: #{tpu_custom_call.1} parent=1 // pred_fallthru
      _
    %v79 = vld [vmem:[#allocation2] sm:$0x3]
    %v80 = vld [vmem:[#allocation7] sm:$0xff]
    %v81 = vld [vmem:[#allocation7 + $0x8] sm:$0xff]
    %v82 = vld [vmem:[#allocation7 + $0x10] sm:$0xff]
    %v83 = vld [vmem:[#allocation7 + $0x18] sm:$0xff]
    %vm84 = vcmask 261120
    %v86 = vsel %vm84, %v79, 0
    %88 = vmatpush.msra.mxu0 0.0
    %89 = vmatpush.msra.mxu0 0.0
    %90 = vmatpush.msra.mxu0 0.0
    %91 = vmatpush.msra.mxu0 0.0
    %92 = vmatpush.msra.mxu0 0.0
    %93 = vmatpush.msra.mxu0 0.0
    %94 = vmatpush.msra.mxu0 0.0
    %95 = vmatpush.msra.mxu0 0.0
    %96 = vmatpush.msra.mxu0 0.0
    %97 = vmatpush.msra.mxu0 0.0
    %98 = vmatpush.msra.mxu0 0.0
    %99 = vmatpush.msra.mxu0 0.0
    %100 = vmatpush.msra.mxu0 %v83
    %101 = vmatpush.msra.mxu0 %v82
    %102 = vmatpush.msra.mxu0 %v81
    %103 = vmatpush.msra.mxu0 %v80
    %104 = vmatmul.f32.gmra.mxu0 %v86
    %v105 = vpop.f32.mrf.mxu0
    %v106 = vadd.f32 0.0, %v105
    %107 = vdwg.mxu0
    %v108 = vmul.f32 %v106, 0.4472136
    %v109 = vld [vmem:[#allocation5] sm:$0xff]
    %v110 = vld [vmem:[#allocation5 + $0x8] sm:$0xff]
    %v111 = vld [vmem:[#allocation8] sm:$0xff]
    %v112 = vld [vmem:[#allocation8 + $0x8] sm:$0xff]
    %v113 = vld [vmem:[#allocation8 + $0x10] sm:$0xff]
    %v114 = vld [vmem:[#allocation8 + $0x18] sm:$0xff]
    %v115 = vld [vmem:[#allocation8 + $0x20] sm:$0xff]
    %v116 = vld [vmem:[#allocation8 + $0x28] sm:$0xff]
    %v117 = vld [vmem:[#allocation8 + $0x30] sm:$0xff]
    %v118 = vld [vmem:[#allocation8 + $0x38] sm:$0xff]
    %v119 = vld [vmem:[#allocation8 + $0x40] sm:$0xff]
    %v120 = vld [vmem:[#allocation8 + $0x48] sm:$0xff]
    %v121 = vld [vmem:[#allocation8 + $0x50] sm:$0xff]
    %v122 = vld [vmem:[#allocation8 + $0x58] sm:$0xff]
    %v123 = vld [vmem:[#allocation8 + $0x60] sm:$0xff]
    %v124 = vld [vmem:[#allocation8 + $0x68] sm:$0xff]
    %v125 = vld [vmem:[#allocation8 + $0x70] sm:$0xff]
    %v126 = vld [vmem:[#allocation8 + $0x78] sm:$0xff]
    %vm127 = vcmask 523264
    %v129 = vsel %vm127, %v109, 0
    %v132 = vsel %vm127, %v110, 0
    %134 = vmatpush.msra.mxu0 0.0
    %135 = vmatpush.msra.mxu0 0.0
    %136 = vmatpush.msra.mxu0 0.0
    %137 = vmatpush.msra.mxu0 0.0
    %138 = vmatpush.msra.mxu0 0.0
    %139 = vmatpush.msra.mxu0 0.0
    %140 = vmatpush.msra.mxu0 0.0
    %141 = vmatpush.msra.mxu0 0.0
    %142 = vmatpush.msra.mxu0 %v125
    %143 = vmatpush.msra.mxu0 %v123
    %144 = vmatpush.msra.mxu0 %v121
    %145 = vmatpush.msra.mxu0 %v119
    %146 = vmatpush.msra.mxu0 %v117
    %147 = vmatpush.msra.mxu0 %v115
    %148 = vmatpush.msra.mxu0 %v113
    %149 = vmatpush.msra.mxu0 %v111
    %150 = vmatmul.f32.gmra.mxu0 %v129
    %v151 = vpop.f32.mrf.mxu0
    %v152 = vadd.f32 0.0, %v151
    %153 = vmatmul.f32.gmra.mxu0 %v132
    %v154 = vpop.f32.mrf.mxu0
    %v155 = vadd.f32 0.0, %v154
    %156 = vdwg.mxu0
    %157 = vmatpush.msra.mxu0 0.0
    %158 = vmatpush.msra.mxu0 0.0
    %159 = vmatpush.msra.mxu0 0.0
    %160 = vmatpush.msra.mxu0 0.0
    %161 = vmatpush.msra.mxu0 0.0
    %162 = vmatpush.msra.mxu0 0.0
    %163 = vmatpush.msra.mxu0 0.0
    %164 = vmatpush.msra.mxu0 0.0
    %165 = vmatpush.msra.mxu0 %v126
    %166 = vmatpush.msra.mxu0 %v124
    %167 = vmatpush.msra.mxu0 %v122
    %168 = vmatpush.msra.mxu0 %v120
    %169 = vmatpush.msra.mxu0 %v118
    %170 = vmatpush.msra.mxu0 %v116
    %171 = vmatpush.msra.mxu0 %v114
    %172 = vmatpush.msra.mxu0 %v112
    %173 = vmatmul.f32.gmra.mxu0 %v129
    %v174 = vpop.f32.mrf.mxu0
    %v175 = vadd.f32 0.0, %v174
    %176 = vmatmul.f32.gmra.mxu0 %v132
    %v177 = vpop.f32.mrf.mxu0
    %v178 = vadd.f32 0.0, %v177
    %179 = vdwg.mxu0
    %v181 = vrot.slane %v108, 1
    %v182 = vperm.slane %v108, 0
    %v183 = vperm.slane %v181, 0
    %v186 = vmul.f32 %v182, %v152
    %v187 = vmul.f32 %v183, %v155
    %188 = vrot.lane.b32.xlu0 %v186, 127
    %v189 = vpop.permute.xlu0 %188
    %190 = vrot.lane.b32.xlu0 %v187, 127
    %v191 = vpop.permute.xlu0 %190
    %v192 = vadd.f32 %v186, %v189
    %v193 = vadd.f32 %v187, %v191
    %194 = vrot.lane.b32.xlu0 %v186, 126
    %v195 = vpop.permute.xlu0 %194
    %196 = vrot.lane.b32.xlu0 %v187, 126
    %v197 = vpop.permute.xlu0 %196
    %v198 = vadd.f32 %v192, %v195
    %v199 = vadd.f32 %v193, %v197
    %200 = vrot.lane.b32.xlu0 %v186, 125
    %v201 = vpop.permute.xlu0 %200
    %202 = vrot.lane.b32.xlu0 %v187, 125
    %v203 = vpop.permute.xlu0 %202
    %v204 = vadd.f32 %v198, %v201
    %v205 = vadd.f32 %v199, %v203
    %206 = vrot.lane.b32.xlu0 %v186, 124
    %v207 = vpop.permute.xlu0 %206
    %208 = vrot.lane.b32.xlu0 %v187, 124
    %v209 = vpop.permute.xlu0 %208
    %v210 = vadd.f32 %v204, %v207
    %v211 = vadd.f32 %v205, %v209
    %v212 = vrot.slane %v210, 4
    %v213 = vmax.f32 %v210, %v212
    %v214 = vrot.slane %v213, 2
    %v215 = vmax.f32 %v213, %v214
    %v216 = vrot.slane %v215, 1
    %v217 = vmax.f32 %v215, %v216
    %v218 = vrot.slane %v211, 4
    %v219 = vmax.f32 %v211, %v218
    %v220 = vrot.slane %v219, 2
    %v221 = vmax.f32 %v219, %v220
    %v222 = vrot.slane %v221, 1
    %v223 = vmax.f32 %v221, %v222
    %v224 = vsub.f32 %v210, %v217
    %v225 = vsub.f32 %v211, %v223
    %v226 = vmul.f32 %v224, 1.442695
    %v227 = vpow.pop %v226
    %v228 = vmul.f32 %v225, 1.442695
    %v229 = vpow.pop %v228
    %v230 = vrot.slane %v227, 4
    %v231 = vadd.f32 %v227, %v230
    %v232 = vrot.slane %v231, 2
    %v233 = vadd.f32 %v231, %v232
    %v234 = vrot.slane %v233, 1
    %v235 = vadd.f32 %v233, %v234
    %v236 = vrot.slane %v229, 4
    %v237 = vadd.f32 %v229, %v236
    %v238 = vrot.slane %v237, 2
    %v239 = vadd.f32 %v237, %v238
    %v240 = vrot.slane %v239, 1
    %v241 = vadd.f32 %v239, %v240
    %v242 = vrcp.pop %v235
    %v243 = vrcp.pop %v241
    %v244 = vmul.f32 %v235, %v242
    %v245 = vmul.f32 %v241, %v243
    %v246 = vsub.f32 2.0, %v244
    %v247 = vsub.f32 2.0, %v245
    %v248 = vmul.f32 %v242, %v246
    %v249 = vmul.f32 %v243, %v247
    %v250 = vmul.f32 %v227, %v248
    %v251 = vmul.f32 %v229, %v249
    %v252 = vmul.f32 %v175, %v250
    %v253 = vmul.f32 %v178, %v251
    %v254 = vrot.slane %v252, 4
    %v255 = vadd.f32 %v252, %v254
    %v256 = vrot.slane %v255, 2
    %v257 = vadd.f32 %v255, %v256
    %v258 = vrot.slane %v257, 1
    %v259 = vadd.f32 %v257, %v258
    %v260 = vrot.slane %v253, 4
    %v261 = vadd.f32 %v253, %v260
    %v262 = vrot.slane %v261, 2
    %v263 = vadd.f32 %v261, %v262
    %v264 = vrot.slane %v263, 1
    %v265 = vadd.f32 %v263, %v264
    %vm268 = vcmask 1041409
    %v269 = vsel %vm268, %v265, %v259
    %271 = vst [vmem:[#allocation10] sm:$0x3] %v269
    // Predicated region
    $region34: #{tpu_custom_call.1} parent=1 // pred_check
      _
    $region35: #{tpu_custom_call.1} parent=1 // pred_check_branch
      %273 = sbr.rel (0) target = $region37
    $region36: #{tpu_custom_call.1} parent=1 // pred_region
      %275 = vsyncadd [#allocation4], 0
      %s277 = sshll.u32 [#allocation10], 4
      %s278 = int_to_ptr.vmem [resolvable:$true] %s277
      %s279 = sshll.u32 %s4, 4
      %s280 = int_to_ptr.hbm [resolvable:$true] %s279
      %282 = dma.vmem_to_hbm [thread:$0]  %s278, 32, %s280, [#allocation4]
    $region37: #{tpu_custom_call.1} parent=1 // pred_fallthru
      _
    // Predicated region
    $region38: #{tpu_custom_call.1} parent=1 // pred_check
      _
    $region39: #{tpu_custom_call.1} parent=1 // pred_check_branch
      %284 = sbr.rel (0) target = $region41
    $region40: #{tpu_custom_call.1} parent=1 // pred_region
      %286 = dma.done [#allocation4], 32
    $region41: #{tpu_custom_call.1} parent=1 // pred_fallthru
      _
    %287 = vsyncpa [#allocation3], 1
    %288 = vsyncpa [#allocation6], 1
    %289 = vsyncpa [#allocation9], 1
    %290 = vsyncpa [#allocation4], 1

</llo_original>
